<compile_context>
chip_gen: v7x
topology: tpu7x:2x2x1
jax: 0.10.0
libtpu: 0.0.40
codegen_flags: <defaults>
</compile_context>

<pallas_src>
import math

import jax
import jax.numpy as jnp
from jax.experimental import pallas as pl
from jax.experimental.pallas import tpu as pltpu

CONF_THRES = 0.2
LOGIT_CONF = math.log(CONF_THRES / (1.0 - CONF_THRES))  # sigmoid(z)>0.2 <=> z>log(0.25)
LOG_CLAMP = -100.0  # F.binary_cross_entropy clamps log terms at -100

LANES = 128
TARGET_TILE_ROWS = 4096  # 2 MiB per f32 input tile; 4 double-buffered tiles = 8 MiB VMEM


def _aux_cons_kernel(pts_ref, logit_ref, loss_ref, cnt_ref):
    p = pts_ref[...]    # (TR, 128) sigmoid values scattered at projected pts, 0 elsewhere
    z = logit_ref[...]  # (TR, 128) raw logits (channel 0 of the NCHW tensor)

    # ---- image side, logit-space BCE terms (numerically stable) ----
    e = jnp.exp(-jnp.abs(z))                        # EUP exp, always in (0, 1]
    one_p_e = 1.0 + e
    log1pe = jnp.log(one_p_e)                       # EUP log
    inv = pl.reciprocal(one_p_e, approx=True)       # EUP approx rcp (near free)
    q = jnp.where(z >= 0.0, inv, e * inv)           # sigmoid(z), weights only
    log_q = jnp.maximum(jnp.minimum(z, 0.0) - log1pe, LOG_CLAMP)     # log sigmoid(z)
    log_1mq = jnp.maximum(-jnp.maximum(z, 0.0) - log1pe, LOG_CLAMP)  # log sigmoid(-z)

    # ---- selection mask: nonzero projected pixel AND confidence threshold ----
    # image-side threshold evaluated in logit space (exact, no approx-rcp dep)
    valid = (p != 0.0) & ((p > CONF_THRES) | (z > LOGIT_CONF))
    vf = valid.astype(jnp.float32)

    # ---- points side (only sigmoid values are available) ----
    p_safe = jnp.where(valid, p, 0.5)               # guard log on masked lanes
    log_p = jnp.maximum(jnp.log(p_safe), LOG_CLAMP)
    log_1mp = jnp.maximum(jnp.log(1.0 - p_safe), LOG_CLAMP)

    # F.binary_cross_entropy(pts, img.detach()) and (img, pts.detach())
    # TODO(synk): forward-only; matching PyTorch's asymmetric .detach() under
    # jax.grad would require a custom_vjp.
    bce_p = -(q * log_p + (1.0 - q) * log_1mp)
    bce_q = -(p * log_q + (1.0 - p) * log_1mq)

    # per-tile partial sums (the 0.5 factor is hoisted into the wrapper);
    # cross-lane reduce goes to the XLU, which is otherwise idle here
    loss_ref[...] = jnp.sum(vf * (bce_p + bce_q)).reshape(1, 1, 1, 1)
    cnt_ref[...] = jnp.sum(vf).reshape(1, 1, 1, 1)


def _round_up(x, m):
    return ((x + m - 1) // m) * m


def _plan_tiles(H, W):
    """Lane-dense tiling plan: each image is viewed as [rows, 128] and cut into
    (TR, 128) tiles.  Returns (TR, rows, needs_pad)."""
    L = H * W
    if L % LANES == 0:
        rows = L // LANES
        if rows <= TARGET_TILE_ROWS:
            return rows, rows, False        # one tile per image, no padding
        tr = (TARGET_TILE_ROWS // 8) * 8
        while tr >= 8:
            if rows % tr == 0:
                return tr, rows, False      # clean multiple-of-8 divisor
            tr -= 8
    # ragged shapes: flatten + zero-pad in the wrapper (padded pixels have
    # p == 0, so they are never selected and contribute nothing)
    rows_raw = pl.cdiv(L, LANES)
    tr = min(TARGET_TILE_ROWS, _round_up(rows_raw, 8))
    rows = _round_up(rows_raw, tr)
    return tr, rows, True


def aux_consistency_loss(aux_pts_imgs, pred_aux_img_seg, batch_size):
    """aux_pts_imgs:      [B, H, W]    f32 (sigmoid values at projected pts, 0 elsewhere)
       pred_aux_img_seg:  [B, C, H, W] f32 logits (channel 0 used, as in PyTorch)."""
    B, H, W = aux_pts_imgs.shape
    Bc, C, Hc, Wc = pred_aux_img_seg.shape
    assert (B, H, W) == (Bc, Hc, Wc)

    L = H * W
    TR, rows, needs_pad = _plan_tiles(H, W)
    n_t = rows // TR

    if not needs_pad:
        # metadata-only reshapes: H, W are the contiguous inner dims
        pts_in = aux_pts_imgs.reshape(B, rows, LANES)
        logit_in = pred_aux_img_seg.reshape(B, C, rows, LANES)
        in_specs = [
            pl.BlockSpec((pl.Squeezed(), TR, LANES), lambda b, t: (b, t, 0)),
            # channel 0 selected inside the BlockSpec: no wrapper-side slice,
            # only the channel-0 tiles are ever DMA'd from HBM
            pl.BlockSpec((pl.Squeezed(), pl.Squeezed(), TR, LANES),
                         lambda b, t: (b, 0, t, 0)),
        ]
    else:
        pad = rows * LANES - L
        pts_in = jnp.pad(aux_pts_imgs.reshape(B, L),
                         ((0, 0), (0, pad))).reshape(B, rows, LANES)
        # ragged fallback only: slicing channel 0 here costs one extra pass over
        # the channel-0 plane, but keeps the kernel lane-dense and unmasked.
        logit_in = jnp.pad(pred_aux_img_seg[:, 0].reshape(B, L),
                           ((0, 0), (0, pad))).reshape(B, rows, LANES)
        in_specs = [
            pl.BlockSpec((pl.Squeezed(), TR, LANES), lambda b, t: (b, t, 0)),
            pl.BlockSpec((pl.Squeezed(), TR, LANES), lambda b, t: (b, t, 0)),
        ]

    loss_parts, cnt_parts = pl.pallas_call(
        _aux_cons_kernel,
        out_shape=(jax.ShapeDtypeStruct((B, n_t, 1, 1), jnp.float32),
                   jax.ShapeDtypeStruct((B, n_t, 1, 1), jnp.float32)),
        grid_spec=pltpu.PrefetchScalarGridSpec(
            num_scalar_prefetch=0,
            grid=(B, n_t),
            in_specs=in_specs,
            out_specs=[
                pl.BlockSpec((1, 1, 1, 1), lambda b, t: (b, t, 0, 0)),
                pl.BlockSpec((1, 1, 1, 1), lambda b, t: (b, t, 0, 0)),
            ]),
        compiler_params=pltpu.CompilerParams(
            # every grid point writes its own output block -> both axes parallel
            dimension_semantics=("parallel", "parallel"),
            vmem_limit_bytes=32 * 1024 * 1024),
        cost_estimate=pl.CostEstimate(
            flops=int(30 * B * L),
            transcendentals=int(5 * B * L),
            bytes_accessed=int(8 * B * L + 8 * B * n_t)),
    )(pts_in, logit_in)

    loss_sum = 0.5 * jnp.sum(loss_parts)      # 0.5 hoisted out of the kernel
    # NOTE: deliberate deviation from PyTorch: when zero pixels are selected
    # PyTorch produces NaN (0/0); we guard with max(cnt, 1) and return 0.
    valid_cnt = jnp.maximum(jnp.sum(cnt_parts), 1.0)
    return (loss_sum / valid_cnt) / jnp.float32(batch_size)


def make_projected_img(batch_size, nh, nw, point_batch_idx, pixel_vu, point_cls_preds):
    """Plain-JAX glue standing in for AuxConsistencyLoss.make_projected_img.

    Scatters sigmoid(point_cls_preds) into a [B, nh, nw] image at the given
    (row, col) pixel per point (indexed assignment semantics).
    """
    # TODO(synk): calib.lidar_to_img camera projection + augmentation undo
    # (per-sample calib objects, numpy/CPU) has no Pallas/JAX equivalent here;
    # deterministic synthetic pixel coordinates stand in for the projection.
    proj = jnp.zeros((batch_size, nh, nw), jnp.float32)
    vals = jax.nn.sigmoid(point_cls_preds.reshape(-1))
    proj = proj.at[point_batch_idx, pixel_vu[:, 0], pixel_vu[:, 1]].set(vals)
    return proj


def _reference_loss(aux_pts_imgs, pred_aux_img_seg, batch_size):
    """Pure-JAX reference matching the PyTorch forward math."""
    p = aux_pts_imgs
    q = jax.nn.sigmoid(pred_aux_img_seg[:, 0])
    valid = (p != 0.0) & ((p > CONF_THRES) | (q > CONF_THRES))

    def bce(inp, tgt):
        inp_s = jnp.where(valid, inp, 0.5)
        log_i = jnp.maximum(jnp.log(inp_s), LOG_CLAMP)
        log_1mi = jnp.maximum(jnp.log(1.0 - inp_s), LOG_CLAMP)
        return -(tgt * log_i + (1.0 - tgt) * log_1mi)

    loss = jnp.where(valid, 0.5 * (bce(p, q) + bce(q, p)), 0.0)
    n = jnp.maximum(jnp.sum(valid.astype(jnp.float32)), 1.0)
    return jnp.sum(loss) / n / batch_size


if __name__ == "__main__":
    key = jax.random.PRNGKey(0)

    def run_case(B, C, nh, nw, n_pts, case_key):
        k1, k2, k3, k4, k5 = jax.random.split(case_key, 5)
        # batch_dict['pred_aux_img_seg']: NCHW logits, channel 0 used
        pred_aux_img_seg = jax.random.normal(k1, (B, C, nh, nw), jnp.float32)
        # aux_pts_dict['point_cls_preds']: one logit per point
        point_cls_preds = jax.random.normal(k2, (n_pts, 1), jnp.float32)
        # synthetic "projected" pixel coordinates per point + batch assignment
        point_batch_idx = jax.random.randint(k3, (n_pts,), 0, B)
        rows_idx = jax.random.randint(k4, (n_pts,), 0, nh)
        cols_idx = jax.random.randint(k5, (n_pts,), 0, nw)
        pixel_vu = jnp.stack([rows_idx, cols_idx], axis=1)

        aux_pts_imgs = make_projected_img(B, nh, nw, point_batch_idx, pixel_vu,
                                          point_cls_preds)

        loss = aux_consistency_loss(aux_pts_imgs, pred_aux_img_seg, B)
        loss = jax.block_until_ready(loss)
        assert bool(jnp.isfinite(loss)), "loss is not finite"

        ref = jax.block_until_ready(
            _reference_loss(aux_pts_imgs, pred_aux_img_seg, B))
        rel_err = abs(float(loss) - float(ref)) / max(abs(float(ref)), 1e-6)
        assert rel_err < 2e-2, (
            f"kernel {float(loss)} vs ref {float(ref)} (rel {rel_err})")

    kA, kB = jax.random.split(key)
    run_case(B=2, C=3, nh=16, nw=16, n_pts=64, case_key=kA)  # lane-aligned fast path
    run_case(B=2, C=3, nh=12, nw=20, n_pts=48, case_key=kB)  # ragged (padded) path

    print("KERNEL_OK")
</pallas_src>

<mosaic_0001>
module attributes {stable_mosaic.version = 11 : i64} {
  func.func @_aux_cons_kernel(%arg0: i32, %arg1: i32, %arg2: memref<1x2x128xf32, #tpu.memory_space<vmem>>, %arg3: memref<1x1x2x128xf32, #tpu.memory_space<vmem>>, %arg4: memref<1x1x1x1xf32, #tpu.memory_space<vmem>>, %arg5: memref<1x1x1x1xf32, #tpu.memory_space<vmem>>) attributes {dimension_semantics = [#tpu.dimension_semantics<parallel>, #tpu.dimension_semantics<parallel>], iteration_bounds = array<i64: 2, 1>, scalar_prefetch = 0 : i64, scratch_operands = 0 : i64, tpu.core_type = #tpu.core_type<tc>, window_params = [{transform_indices = @transform_0, window_bounds = array<i64: 1, 2, 128>}, {transform_indices = @transform_1, window_bounds = array<i64: 1, 1, 2, 128>}, {transform_indices = @transform_2, window_bounds = array<i64: 1, 1, 1, 1>}, {transform_indices = @transform_3, window_bounds = array<i64: 1, 1, 1, 1>}]} {
    %c0 = arith.constant 0 : index
    %c0_0 = arith.constant 0 : index
    %c0_1 = arith.constant 0 : index
    %0 = vector.load %arg2[%c0, %c0_0, %c0_1] : memref<1x2x128xf32, #tpu.memory_space<vmem>>, vector<1x2x128xf32>
    %1 = vector.shape_cast %0 : vector<1x2x128xf32> to vector<2x128xf32>
    %c0_2 = arith.constant 0 : index
    %c0_3 = arith.constant 0 : index
    %c0_4 = arith.constant 0 : index
    %c0_5 = arith.constant 0 : index
    %2 = vector.load %arg3[%c0_2, %c0_3, %c0_4, %c0_5] : memref<1x1x2x128xf32, #tpu.memory_space<vmem>>, vector<1x1x2x128xf32>
    %3 = vector.shape_cast %2 : vector<1x1x2x128xf32> to vector<2x128xf32>
    %4 = math.absf %3 : vector<2x128xf32>
    %cst = arith.constant 0.000000e+00 : f32
    %5 = vector.broadcast %cst : f32 to vector<2x128xf32>
    %6 = arith.subf %5, %4 : vector<2x128xf32>
    %7 = math.exp %6 : vector<2x128xf32>
    %cst_6 = arith.constant 1.000000e+00 : f32
    %8 = vector.broadcast %cst_6 : f32 to vector<2x128xf32>
    %9 = arith.addf %8, %7 : vector<2x128xf32>
    %10 = math.log %9 : vector<2x128xf32>
    %11 = tpu.reciprocal %9 {approx = true} : vector<2x128xf32> -> vector<2x128xf32>
    %cst_7 = arith.constant 0.000000e+00 : f32
    %12 = vector.broadcast %cst_7 : f32 to vector<2x128xf32>
    %13 = arith.cmpf oge, %3, %12 : vector<2x128xf32>
    %14 = arith.mulf %7, %11 : vector<2x128xf32>
    %15 = arith.select %13, %11, %14 : vector<2x128xi1>, vector<2x128xf32>
    %cst_8 = arith.constant 0.000000e+00 : f32
    %16 = vector.broadcast %cst_8 : f32 to vector<2x128xf32>
    %17 = arith.minimumf %3, %16 : vector<2x128xf32>
    %18 = arith.subf %17, %10 : vector<2x128xf32>
    %cst_9 = arith.constant -1.000000e+02 : f32
    %19 = vector.broadcast %cst_9 : f32 to vector<2x128xf32>
    %20 = arith.maximumf %18, %19 : vector<2x128xf32>
    %cst_10 = arith.constant 0.000000e+00 : f32
    %21 = vector.broadcast %cst_10 : f32 to vector<2x128xf32>
    %22 = arith.maximumf %3, %21 : vector<2x128xf32>
    %cst_11 = arith.constant 0.000000e+00 : f32
    %23 = vector.broadcast %cst_11 : f32 to vector<2x128xf32>
    %24 = arith.subf %23, %22 : vector<2x128xf32>
    %25 = arith.subf %24, %10 : vector<2x128xf32>
    %cst_12 = arith.constant -1.000000e+02 : f32
    %26 = vector.broadcast %cst_12 : f32 to vector<2x128xf32>
    %27 = arith.maximumf %25, %26 : vector<2x128xf32>
    %cst_13 = arith.constant 0.000000e+00 : f32
    %28 = vector.broadcast %cst_13 : f32 to vector<2x128xf32>
    %29 = arith.cmpf one, %1, %28 : vector<2x128xf32>
    %cst_14 = arith.constant 2.000000e-01 : f32
    %30 = vector.broadcast %cst_14 : f32 to vector<2x128xf32>
    %31 = arith.cmpf ogt, %1, %30 : vector<2x128xf32>
    %cst_15 = arith.constant -1.38629436 : f32
    %32 = vector.broadcast %cst_15 : f32 to vector<2x128xf32>
    %33 = arith.cmpf ogt, %3, %32 : vector<2x128xf32>
    %34 = arith.ori %31, %33 : vector<2x128xi1>
    %35 = arith.andi %29, %34 : vector<2x128xi1>
    %36 = arith.extui %35 : vector<2x128xi1> to vector<2x128xi32>
    %37 = arith.sitofp %36 : vector<2x128xi32> to vector<2x128xf32>
    %cst_16 = arith.constant 5.000000e-01 : f32
    %38 = vector.broadcast %cst_16 : f32 to vector<2x128xf32>
    %39 = arith.select %35, %1, %38 : vector<2x128xi1>, vector<2x128xf32>
    %40 = math.log %39 : vector<2x128xf32>
    %cst_17 = arith.constant -1.000000e+02 : f32
    %41 = vector.broadcast %cst_17 : f32 to vector<2x128xf32>
    %42 = arith.maximumf %40, %41 : vector<2x128xf32>
    %cst_18 = arith.constant 1.000000e+00 : f32
    %43 = vector.broadcast %cst_18 : f32 to vector<2x128xf32>
    %44 = arith.subf %43, %39 : vector<2x128xf32>
    %45 = math.log %44 : vector<2x128xf32>
    %cst_19 = arith.constant -1.000000e+02 : f32
    %46 = vector.broadcast %cst_19 : f32 to vector<2x128xf32>
    %47 = arith.maximumf %45, %46 : vector<2x128xf32>
    %48 = arith.mulf %15, %42 : vector<2x128xf32>
    %cst_20 = arith.constant 1.000000e+00 : f32
    %49 = vector.broadcast %cst_20 : f32 to vector<2x128xf32>
    %50 = arith.subf %49, %15 : vector<2x128xf32>
    %51 = arith.mulf %50, %47 : vector<2x128xf32>
    %52 = arith.addf %48, %51 : vector<2x128xf32>
    %cst_21 = arith.constant 0.000000e+00 : f32
    %53 = vector.broadcast %cst_21 : f32 to vector<2x128xf32>
    %54 = arith.subf %53, %52 : vector<2x128xf32>
    %55 = arith.mulf %1, %20 : vector<2x128xf32>
    %cst_22 = arith.constant 1.000000e+00 : f32
    %56 = vector.broadcast %cst_22 : f32 to vector<2x128xf32>
    %57 = arith.subf %56, %1 : vector<2x128xf32>
    %58 = arith.mulf %57, %27 : vector<2x128xf32>
    %59 = arith.addf %55, %58 : vector<2x128xf32>
    %cst_23 = arith.constant 0.000000e+00 : f32
    %60 = vector.broadcast %cst_23 : f32 to vector<2x128xf32>
    %61 = arith.subf %60, %59 : vector<2x128xf32>
    %62 = arith.addf %54, %61 : vector<2x128xf32>
    %63 = arith.mulf %37, %62 : vector<2x128xf32>
    %64 = vector.shape_cast %63 : vector<2x128xf32> to vector<1x2x128xf32>
    %cst_24 = arith.constant dense<0.000000e+00> : vector<1xf32>
    %65 = vector.multi_reduction <add>, %64, %cst_24 [1, 2] : vector<1x2x128xf32> to vector<1xf32>
    %66 = vector.shape_cast %65 : vector<1xf32> to vector<1x1x1xf32>
    %67 = vector.extract %66[0, 0, 0] : f32 from vector<1x1x1xf32>
    %68 = vector.broadcast %67 : f32 to vector<1x1x1x1xf32>
    %c0_25 = arith.constant 0 : index
    %c0_26 = arith.constant 0 : index
    %c0_27 = arith.constant 0 : index
    %c0_28 = arith.constant 0 : index
    %69 = vector.load %arg4[%c0_25, %c0_26, %c0_27, %c0_28] : memref<1x1x1x1xf32, #tpu.memory_space<vmem>>, vector<1x1x1x1xf32>
    tpu.vector_store %arg4[%c0_25, %c0_26, %c0_27, %c0_28], %68 {strides = array<i32>} : memref<1x1x1x1xf32, #tpu.memory_space<vmem>>, vector<1x1x1x1xf32>,
    %70 = vector.shape_cast %37 : vector<2x128xf32> to vector<1x2x128xf32>
    %cst_29 = arith.constant dense<0.000000e+00> : vector<1xf32>
    %71 = vector.multi_reduction <add>, %70, %cst_29 [1, 2] : vector<1x2x128xf32> to vector<1xf32>
    %72 = vector.shape_cast %71 : vector<1xf32> to vector<1x1x1xf32>
    %73 = vector.extract %72[0, 0, 0] : f32 from vector<1x1x1xf32>
    %74 = vector.broadcast %73 : f32 to vector<1x1x1x1xf32>
    %c0_30 = arith.constant 0 : index
    %c0_31 = arith.constant 0 : index
    %c0_32 = arith.constant 0 : index
    %c0_33 = arith.constant 0 : index
    %75 = vector.load %arg5[%c0_30, %c0_31, %c0_32, %c0_33] : memref<1x1x1x1xf32, #tpu.memory_space<vmem>>, vector<1x1x1x1xf32>
    tpu.vector_store %arg5[%c0_30, %c0_31, %c0_32, %c0_33], %74 {strides = array<i32>} : memref<1x1x1x1xf32, #tpu.memory_space<vmem>>, vector<1x1x1x1xf32>,
    return
  }
  func.func @transform_0(%arg0: i32, %arg1: i32) -> (i32, i32, i32) {
    %c0_i32 = arith.constant 0 : i32
    %c0_i32_0 = arith.constant 0 : i32
    return %arg0, %arg1, %c0_i32 : i32, i32, i32
  }
  func.func @transform_1(%arg0: i32, %arg1: i32) -> (i32, i32, i32, i32) {
    %c0_i32 = arith.constant 0 : i32
    %c0_i32_0 = arith.constant 0 : i32
    %c0_i32_1 = arith.constant 0 : i32
    return %arg0, %c0_i32, %arg1, %c0_i32_0 : i32, i32, i32, i32
  }
  func.func @transform_2(%arg0: i32, %arg1: i32) -> (i32, i32, i32, i32) {
    %c0_i32 = arith.constant 0 : i32
    %c0_i32_0 = arith.constant 0 : i32
    %c0_i32_1 = arith.constant 0 : i32
    return %arg0, %arg1, %c0_i32, %c0_i32_0 : i32, i32, i32, i32
  }
  func.func @transform_3(%arg0: i32, %arg1: i32) -> (i32, i32, i32, i32) {
    %c0_i32 = arith.constant 0 : i32
    %c0_i32_0 = arith.constant 0 : i32
    %c0_i32_1 = arith.constant 0 : i32
    return %arg0, %arg1, %c0_i32, %c0_i32_0 : i32, i32, i32, i32
  }
}

</mosaic_0001>

<llo_original>
// kernel: tpu_custom_call.1
$region0: #{tpu_custom_call.1}
  #allocation0 [shape = 'u32[]', space=smem, size = 0x4, offset = 0x4, fixed_abs, tag = 'smem constant byte address 0x4 - core index']
  #allocation1 [shape = 'u32[144,128]{1,0:T(1,128)}', space=vmem, size = 0x12000, scoped, tag = 'internal scratch']
  %s0 = inlined_call_operand.hbm [shape: f32[2,2,128], index: 0, kind: input, shape index: {}]
  %s1 = inlined_call_operand.hbm [shape: f32[2,3,2,128], index: 1, kind: input, shape index: {}]
  %s2 = inlined_call_operand.vmem [shape: f32[2,1,1,1], index: 2, kind: output, shape index: {0}]
  %s3 = inlined_call_operand.vmem [shape: f32[2,1,1,1], index: 3, kind: output, shape index: {1}]
  %4 = xla_tuple %s2, %s3
  %s5 = sld [smem:[#allocation0]]
  $region57: #{tpu_custom_call.1} parent=0
    _
  %s7 = ssub.s32 1, %s5
  %s8 = scalar_select 0, %s7, %s5
  $region1: #{tpu_custom_call.1} parent=0
    #allocation2 [shape = 'u8[2048]{0}', space=vmem, size = 0x800, scoped, tag = 'input window, operand 0']
    #allocation3 [shape = 's32[2]{0}', space=sflag, size = 0x8, scoped, tag = 'scoped memory for tpu_custom_call.1']
    #allocation4 [shape = 'u8[2048]{0}', space=vmem, size = 0x800, scoped, tag = 'input window, operand 1']
    #allocation5 [shape = 's32[2]{0}', space=sflag, size = 0x8, scoped, tag = 'scoped memory for tpu_custom_call.1']
    %9 = vsyncpa [#allocation3], 0
    %s10 = scalar_lea.sflag [#allocation3], 1
    %11 = vsyncpa %s10, 0
    %12 = vsyncpa [#allocation5], 0
    %s13 = scalar_lea.sflag [#allocation5], 1
    %14 = vsyncpa %s13, 0
    loop: start=0, step=1, limit=4
    $region2: #{tpu_custom_call.1} parent=1 // loop_pre_header
      _
    $region3: #{tpu_custom_call.1} parent=1 // loop_header
      %s16 = sphi 0, %s20
      %p17 = scmp.ge.s32.totalorder %s16, 4
      %s23 = sphi 0, %s35
      %s24 = sphi 0, %s31
      %s25 = sphi 0, %s23
      %s26 = sphi 0, %s24
      %s27 = sphi 0, %s25
      %s28 = sphi 0, %s26
      %s40 = sphi 0, %s42
      %s43 = sphi 0, %s40
      %s44 = sphi 0, %s43
      %s60 = sphi 0, %s44
      %s68 = sphi 0, %s70
      %s71 = sphi 0, %s68
      %s72 = sphi 0, %s71
      %s88 = sphi 0, %s72
      %s96 = sphi 0, %s98
      %s99 = sphi 0, %s96
      %s100 = sphi 0, %s99
      %s116 = sphi 0, %s100
      %s124 = sphi 0, %s126
      %s127 = sphi 0, %s124
      %s128 = sphi 0, %s127
      %s144 = sphi 0, %s128
    $region4: #{tpu_custom_call.1} parent=1 // loop_header_branch
      %19 = sbr.rel (%p17) target = $region8
    $region5: #{tpu_custom_call.1} parent=1 // loop_body
      %s21 = ssub.s32 %s16, 1
      %s22 = ssub.s32 %s16, 2
      %s29 = sadd.s32 1, %s24
      %p30 = scmp.ge.s32.totalorder %s29, 1
      %s31 = scalar_select %p30, 0, %s29
      %s32 = sadd.s32 1, %s23
      %s33 = scalar_select %p30, %s32, %s23
      %p34 = scmp.ge.s32.totalorder %s33, 2
      %s35 = scalar_select %p34, 0, %s33
      %s36 = ssub.s32 %s23, %s35
      %s37 = ssub.s32 %s24, %s31
      %s38 = sor.u32 %s36, %s37
      %p39 = scmp.eq.s32.totalorder %s38, 0
      %s41 = sadd.s32 %s40, 1
      %s42 = scalar_select %p39, %s40, %s41
      %p45 = pneg %p39
      %p46 = scmp.eq.s32.totalorder %s16, 1
      %p47 = por %p45, %p46
      %p48 = scmp.ne.s32.totalorder %s40, %s43
      %p49 = scmp.eq.s32.totalorder %s16, 0
      %p50 = por %p48, %p49
      %p51 = scmp.ne.s32.totalorder %s40, %s43
      %p52 = scmp.eq.s32.totalorder %s21, 1
      %p53 = por %p51, %p52
      %p54 = scmp.ne.s32.totalorder %s43, %s44
      %p55 = scmp.eq.s32.totalorder %s21, 0
      %p56 = por %p54, %p55
      %p57 = scmp.ne.s32.totalorder %s43, %s44
      %p58 = scmp.eq.s32.totalorder %s22, 1
      %p59 = por %p57, %p58
      %p61 = scmp.ne.s32.totalorder %s44, %s60
      %p62 = scmp.eq.s32.totalorder %s22, 0
      %p63 = por %p61, %p62
      %s64 = ssub.s32 %s23, %s35
      %s65 = ssub.s32 %s24, %s31
      %s66 = sor.u32 %s64, %s65
      %p67 = scmp.eq.s32.totalorder %s66, 0
      %s69 = sadd.s32 %s68, 1
      %s70 = scalar_select %p67, %s68, %s69
      %p73 = pneg %p67
      %p74 = scmp.eq.s32.totalorder %s16, 1
      %p75 = por %p73, %p74
      %p76 = scmp.ne.s32.totalorder %s68, %s71
      %p77 = scmp.eq.s32.totalorder %s16, 0
      %p78 = por %p76, %p77
      %p79 = scmp.ne.s32.totalorder %s68, %s71
      %p80 = scmp.eq.s32.totalorder %s21, 1
      %p81 = por %p79, %p80
      %p82 = scmp.ne.s32.totalorder %s71, %s72
      %p83 = scmp.eq.s32.totalorder %s21, 0
      %p84 = por %p82, %p83
      %p85 = scmp.ne.s32.totalorder %s71, %s72
      %p86 = scmp.eq.s32.totalorder %s22, 1
      %p87 = por %p85, %p86
      %p89 = scmp.ne.s32.totalorder %s72, %s88
      %p90 = scmp.eq.s32.totalorder %s22, 0
      %p91 = por %p89, %p90
      %s92 = ssub.s32 %s23, %s35
      %s93 = ssub.s32 %s24, %s31
      %s94 = sor.u32 %s92, %s93
      %p95 = scmp.eq.s32.totalorder %s94, 0
      %s97 = sadd.s32 %s96, 1
      %s98 = scalar_select %p95, %s96, %s97
      %p101 = pneg %p95
      %p102 = scmp.eq.s32.totalorder %s16, 1
      %p103 = por %p101, %p102
      %p104 = scmp.ne.s32.totalorder %s96, %s99
      %p105 = scmp.eq.s32.totalorder %s16, 0
      %p106 = por %p104, %p105
      %p107 = scmp.ne.s32.totalorder %s96, %s99
      %p108 = scmp.eq.s32.totalorder %s21, 1
      %p109 = por %p107, %p108
      %p110 = scmp.ne.s32.totalorder %s99, %s100
      %p111 = scmp.eq.s32.totalorder %s21, 0
      %p112 = por %p110, %p111
      %p113 = scmp.ne.s32.totalorder %s99, %s100
      %p114 = scmp.eq.s32.totalorder %s22, 1
      %p115 = por %p113, %p114
      %p117 = scmp.ne.s32.totalorder %s100, %s116
      %p118 = scmp.eq.s32.totalorder %s22, 0
      %p119 = por %p117, %p118
      %s120 = ssub.s32 %s23, %s35
      %s121 = ssub.s32 %s24, %s31
      %s122 = sor.u32 %s120, %s121
      %p123 = scmp.eq.s32.totalorder %s122, 0
      %s125 = sadd.s32 %s124, 1
      %s126 = scalar_select %p123, %s124, %s125
      %p129 = pneg %p123
      %p130 = scmp.eq.s32.totalorder %s16, 1
      %p131 = por %p129, %p130
      %p132 = scmp.ne.s32.totalorder %s124, %s127
      %p133 = scmp.eq.s32.totalorder %s16, 0
      %p134 = por %p132, %p133
      %p135 = scmp.ne.s32.totalorder %s124, %s127
      %p136 = scmp.eq.s32.totalorder %s21, 1
      %p137 = por %p135, %p136
      %p138 = scmp.ne.s32.totalorder %s127, %s128
      %p139 = scmp.eq.s32.totalorder %s21, 0
      %p140 = por %p138, %p139
      %p141 = scmp.ne.s32.totalorder %s127, %s128
      %p142 = scmp.eq.s32.totalorder %s22, 1
      %p143 = por %p141, %p142
      %p145 = scmp.ne.s32.totalorder %s128, %s144
      %p146 = scmp.eq.s32.totalorder %s22, 0
      %p147 = por %p145, %p146
      %p148 = scmp.le.s32.totalorder 1, %s16
      %p149 = scmp.lt.s32.totalorder %s16, 3
      %p150 = pnand %p148, %p149
      %p151 = pneg %p150
      // Predicated region
      $region9: #{tpu_custom_call.1} parent=5 // pred_check
        _
      $region10: #{tpu_custom_call.1} parent=5 // pred_check_branch
        %153 = sbr.rel (%p150) target = $region12
      $region11: #{tpu_custom_call.1} parent=5 // pred_region
        %s154 = ssub.s32 %s16, 1
      $region12: #{tpu_custom_call.1} parent=5 // pred_fallthru
        _
      %p155 = scmp.lt.s32.totalorder %s16, 2
      // Predicated region
      $region13: #{tpu_custom_call.1} parent=5 // pred_check
        %p156 = pneg %p155
      $region14: #{tpu_custom_call.1} parent=5 // pred_check_branch
        %158 = sbr.rel (%p156) target = $region16
      $region15: #{tpu_custom_call.1} parent=5 // pred_region
        // Predicated region
        $region17: #{tpu_custom_call.1} parent=15 // pred_check
          %p159 = pneg %p50
        $region18: #{tpu_custom_call.1} parent=15 // pred_check_branch
          %161 = sbr.rel (%p159) target = $region20
        $region19: #{tpu_custom_call.1} parent=15 // pred_region
          %s162 = sand.u32 %s40, 1
          %s163 = scalar_lea.sflag [#allocation3], %s162
          %s164 = sand.u32 %s40, 1
          %s165 = smul.addr %s164, 2
          %s166 = scalar_lea.vmem [#allocation2], %s165
          %s168 = ssub.s32 32, 32
          %169 = vsyncadd %s163, %s168
          %s170 = sadd.s32 %s24, %s23
          %s171 = smul.addr %s170, 32
          %s172 = scalar_lea.hbm %s0, %s171
          %s174 = sshll.u32 %s166, 4
          %s175 = int_to_ptr.vmem [resolvable:$true] %s174
          %177 = dma.hbm_to_vmem [thread:$0]  %s172, 32, %s175, %s163
        $region20: #{tpu_custom_call.1} parent=15 // pred_fallthru
          _
        // Predicated region
        $region21: #{tpu_custom_call.1} parent=15 // pred_check
          %p178 = pneg %p78
        $region22: #{tpu_custom_call.1} parent=15 // pred_check_branch
          %180 = sbr.rel (%p178) target = $region24
        $region23: #{tpu_custom_call.1} parent=15 // pred_region
          %s181 = sand.u32 %s68, 1
          %s182 = scalar_lea.sflag [#allocation5], %s181
          %s183 = sand.u32 %s68, 1
          %s184 = smul.addr %s183, 2
          %s185 = scalar_lea.vmem [#allocation4], %s184
          %s187 = ssub.s32 32, 32
          %188 = vsyncadd %s182, %s187
          %s189 = smul.addr %s23, 3
          %s190 = sadd.s32 %s24, %s189
          %s191 = smul.addr %s190, 32
          %s192 = scalar_lea.hbm %s1, %s191
          %s194 = sshll.u32 %s185, 4
          %s195 = int_to_ptr.vmem [resolvable:$true] %s194
          %197 = dma.hbm_to_vmem [thread:$0]  %s192, 32, %s195, %s182
        $region24: #{tpu_custom_call.1} parent=15 // pred_fallthru
          _
      $region16: #{tpu_custom_call.1} parent=5 // pred_fallthru
        _
      %p198 = scmp.le.s32.totalorder 1, %s16
      %p199 = scmp.lt.s32.totalorder %s16, 3
      %p200 = pnand %p198, %p199
      %p201 = pneg %p200
      // Predicated region
      $region25: #{tpu_custom_call.1} parent=5 // pred_check
        _
      $region26: #{tpu_custom_call.1} parent=5 // pred_check_branch
        %203 = sbr.rel (%p200) target = $region28
      $region27: #{tpu_custom_call.1} parent=5 // pred_region
        %s204 = ssub.s32 %s16, 1
        %s205 = sand.u32 %s43, 1
        %s206 = scalar_lea.sflag [#allocation3], %s205
        %s207 = sand.u32 %s43, 1
        %s208 = smul.addr %s207, 2
        %s209 = scalar_lea.vmem [#allocation2], %s208
        // Predicated region
        $region29: #{tpu_custom_call.1} parent=27 // pred_check
          %p210 = pneg %p56
        $region30: #{tpu_custom_call.1} parent=27 // pred_check_branch
          %212 = sbr.rel (%p210) target = $region32
        $region31: #{tpu_custom_call.1} parent=27 // pred_region
          %213 = dma.done %s206, 32
        $region32: #{tpu_custom_call.1} parent=27 // pred_fallthru
          _
        %s214 = sand.u32 %s71, 1
        %s215 = scalar_lea.sflag [#allocation5], %s214
        %s216 = sand.u32 %s71, 1
        %s217 = smul.addr %s216, 2
        %s218 = scalar_lea.vmem [#allocation4], %s217
        // Predicated region
        $region33: #{tpu_custom_call.1} parent=27 // pred_check
          %p219 = pneg %p84
        $region34: #{tpu_custom_call.1} parent=27 // pred_check_branch
          %221 = sbr.rel (%p219) target = $region36
        $region35: #{tpu_custom_call.1} parent=27 // pred_region
          %222 = dma.done %s215, 32
        $region36: #{tpu_custom_call.1} parent=27 // pred_fallthru
          _
        %s223 = sand.u32 %s43, 1
        %s224 = scalar_lea.sflag [#allocation3], %s223
        %s225 = sand.u32 %s43, 1
        %s226 = smul.addr %s225, 2
        %s227 = scalar_lea.vmem [#allocation2], %s226
        %p228 = pneg %p56
        %p229 = pneg %p53
        %s230 = sand.u32 %s71, 1
        %s231 = scalar_lea.sflag [#allocation5], %s230
        %s232 = sand.u32 %s71, 1
        %s233 = smul.addr %s232, 2
        %s234 = scalar_lea.vmem [#allocation4], %s233
        %p235 = pneg %p84
        %p236 = pneg %p81
        %p237 = pneg %p112
        %p238 = pneg %p109
        %p239 = scmp.lt.s32.totalorder %s25, 1
        %s240 = scalar_select %p239, %s25, 1
        %p241 = scmp.lt.s32.totalorder %s26, 0
        %s242 = scalar_select %p241, %s26, 0
        %s243 = sadd.s32 %s242, %s240
        %s244 = scalar_lea.vmem %s2, %s243
        %p245 = pneg %p140
        %p246 = pneg %p137
        %p247 = scmp.lt.s32.totalorder %s25, 1
        %s248 = scalar_select %p247, %s25, 1
        %p249 = scmp.lt.s32.totalorder %s26, 0
        %s250 = scalar_select %p249, %s26, 0
        %s251 = sadd.s32 %s250, %s248
        %s252 = scalar_lea.vmem %s3, %s251
        %p253 = scmp.lt.s32.totalorder %s25, 1
        %s254 = scalar_select %p253, %s25, 1
        %p255 = scmp.lt.s32.totalorder %s26, 0
        %s256 = scalar_select %p255, %s26, 0
        %s257 = sadd.s32 %s256, %s254
        %s258 = scalar_lea.vmem %s2, %s257
        %p259 = scmp.lt.s32.totalorder %s25, 1
        %s260 = scalar_select %p259, %s25, 1
        %p261 = scmp.lt.s32.totalorder %s26, 0
        %s262 = scalar_select %p261, %s26, 0
        %s263 = sadd.s32 %s262, %s260
        %s264 = scalar_lea.vmem %s3, %s263
        %v265 = vld [vmem:[%s209] sm:$0x3]
        %v266 = vld [vmem:[%s218] sm:$0x3]
        %v267 = vand.u32 2147483647, %v266
        %v268 = vsub.f32 0.0, %v267
        %v269 = vmul.f32 %v268, 1.442695
        %v270 = vpow.pop %v269
        %v271 = vadd.f32 %v270, 1.0
        %v272 = vlog2.pop %v271
        %v273 = vmul.f32 %v272, 0.6931472
        %v274 = vrcp.pop %v271
        %vm275 = vcmp.ge.f32.partialorder %v266, 0.0
        %v276 = vmul.f32 %v270, %v274
        %v277 = vsel %vm275, %v274, %v276
        %v278 = vmin.f32 %v266, 0.0
        %v279 = vsub.f32 %v278, %v273
        %v280 = vmax.f32 %v279, -100.0
        %v281 = vmax.f32 %v266, 0.0
        %v282 = vsub.f32 0.0, %v281
        %v283 = vsub.f32 %v282, %v273
        %v284 = vmax.f32 %v283, -100.0
        %vm285 = vcmp.ne.f32.partialorder %v265, 0.0
        %vm286 = vcmp.gt.f32.partialorder %v265, 0.2
        %vm287 = vcmp.gt.f32.partialorder %v266, -1.3862944
        %vm288 = vmor %vm286, %vm287
        %vm289 = vmand %vm285, %vm288
        %v290 = vsel %vm289, 1, 0
        %v291 = vcvt.s32.f32 %v290
        %v292 = vsel %vm289, %v265, 0.5
        %v293 = vlog2.pop %v292
        %v294 = vmul.f32 %v293, 0.6931472
        %v295 = vmax.f32 %v294, -100.0
        %v296 = vsub.f32 1.0, %v292
        %v297 = vlog2.pop %v296
        %v298 = vmul.f32 %v297, 0.6931472
        %v299 = vmax.f32 %v298, -100.0
        %v300 = vmul.f32 %v277, %v295
        %v301 = vsub.f32 1.0, %v277
        %v302 = vmul.f32 %v301, %v299
        %v303 = vadd.f32 %v300, %v302
        %v304 = vsub.f32 0.0, %v303
        %v305 = vmul.f32 %v265, %v280
        %v306 = vsub.f32 1.0, %v265
        %v307 = vmul.f32 %v306, %v284
        %v308 = vadd.f32 %v305, %v307
        %v309 = vsub.f32 0.0, %v308
        %v310 = vadd.f32 %v304, %v309
        %v311 = vmul.f32 %v291, %v310
        %vm312 = vcmask 1041408
        %v313 = vsel %vm312, %v311, 0.0
        %314 = vadd.xlane.f32.xlu0 %v313
        %v315 = vpop.xlane.xlu0 %314
        %v316 = vrot.slane %v315, 4
        %v317 = vadd.f32 %v315, %v316
        %v318 = vrot.slane %v317, 2
        %v319 = vadd.f32 %v317, %v318
        %v320 = vrot.slane %v319, 1
        %v321 = vadd.f32 %v319, %v320
        %s322 = vtos %v321
        %v323 = vstv %s322
        %vm324 = vcmask 0
        %325 = vst.msk [vmem:[%s258] sm:$0x1] %vm324, %v323
        %v326 = vsel %vm312, %v291, 0.0
        %327 = vadd.xlane.f32.xlu0 %v326
        %v328 = vpop.xlane.xlu0 %327
        %v329 = vrot.slane %v328, 4
        %v330 = vadd.f32 %v328, %v329
        %v331 = vrot.slane %v330, 2
        %v332 = vadd.f32 %v330, %v331
        %v333 = vrot.slane %v332, 1
        %v334 = vadd.f32 %v332, %v333
        %s335 = vtos %v334
        %v336 = vstv %s335
        %337 = vst.msk [vmem:[%s264] sm:$0x1] %vm324, %v336
        %p338 = scmp.lt.s32.totalorder %s25, 1
        %s339 = scalar_select %p338, %s25, 1
        %p340 = scmp.lt.s32.totalorder %s26, 0
        %s341 = scalar_select %p340, %s26, 0
        %s342 = sadd.s32 %s341, %s339
        %s343 = scalar_lea.vmem %s2, %s342
        %p344 = scmp.lt.s32.totalorder %s25, 1
        %s345 = scalar_select %p344, %s25, 1
        %p346 = scmp.lt.s32.totalorder %s26, 0
        %s347 = scalar_select %p346, %s26, 0
        %s348 = sadd.s32 %s347, %s345
        %s349 = scalar_lea.vmem %s3, %s348
        // Predicated region
        $region37: #{tpu_custom_call.1} parent=27 // pred_check
          %p350 = pneg %p109
        $region38: #{tpu_custom_call.1} parent=27 // pred_check_branch
          %352 = sbr.rel (%p350) target = $region40
        $region39: #{tpu_custom_call.1} parent=27 // pred_region
          _
        $region40: #{tpu_custom_call.1} parent=27 // pred_fallthru
          _
        // Predicated region
        $region41: #{tpu_custom_call.1} parent=27 // pred_check
          %p353 = pneg %p137
        $region42: #{tpu_custom_call.1} parent=27 // pred_check_branch
          %355 = sbr.rel (%p353) target = $region44
        $region43: #{tpu_custom_call.1} parent=27 // pred_region
          _
        $region44: #{tpu_custom_call.1} parent=27 // pred_fallthru
          _
      $region28: #{tpu_custom_call.1} parent=5 // pred_fallthru
        _
      %p356 = scmp.le.s32.totalorder 2, %s16
      // Predicated region
      $region45: #{tpu_custom_call.1} parent=5 // pred_check
        %p357 = pneg %p356
      $region46: #{tpu_custom_call.1} parent=5 // pred_check_branch
        %359 = sbr.rel (%p357) target = $region48
      $region47: #{tpu_custom_call.1} parent=5 // pred_region
        %s360 = ssub.s32 %s16, 2
        // Predicated region
        $region49: #{tpu_custom_call.1} parent=47 // pred_check
          %p361 = pneg %p115
        $region50: #{tpu_custom_call.1} parent=47 // pred_check_branch
          %363 = sbr.rel (%p361) target = $region52
        $region51: #{tpu_custom_call.1} parent=47 // pred_region
          %p364 = scmp.lt.s32.totalorder %s27, 1
          %s365 = scalar_select %p364, %s27, 1
          %p366 = scmp.lt.s32.totalorder %s28, 0
          %s367 = scalar_select %p366, %s28, 0
          %s368 = sadd.s32 %s367, %s365
          %s369 = scalar_lea.vmem %s2, %s368
        $region52: #{tpu_custom_call.1} parent=47 // pred_fallthru
          _
        // Predicated region
        $region53: #{tpu_custom_call.1} parent=47 // pred_check
          %p370 = pneg %p143
        $region54: #{tpu_custom_call.1} parent=47 // pred_check_branch
          %372 = sbr.rel (%p370) target = $region56
        $region55: #{tpu_custom_call.1} parent=47 // pred_region
          %p373 = scmp.lt.s32.totalorder %s27, 1
          %s374 = scalar_select %p373, %s27, 1
          %p375 = scmp.lt.s32.totalorder %s28, 0
          %s376 = scalar_select %p375, %s28, 0
          %s377 = sadd.s32 %s376, %s374
          %s378 = scalar_lea.vmem %s3, %s377
        $region56: #{tpu_custom_call.1} parent=47 // pred_fallthru
          _
      $region48: #{tpu_custom_call.1} parent=5 // pred_fallthru
        _
    $region6: #{tpu_custom_call.1} parent=1 // loop_footer
      %s20 = sadd.s32 1, %s16
    $region7: #{tpu_custom_call.1} parent=1 // loop_footer_branch
      %15 = sbr.rel target = $region3
    $region8: #{tpu_custom_call.1} parent=1 // loop_exit
      _
    %379 = vsyncpa [#allocation3], 1
    %s380 = scalar_lea.sflag [#allocation3], 1
    %381 = vsyncpa %s380, 1
    %382 = vsyncpa [#allocation5], 1
    %s383 = scalar_lea.sflag [#allocation5], 1
    %384 = vsyncpa %s383, 1

</llo_original>
